<compile_context>
chip_gen: v7x
topology: tpu7x:2x2x1
jax: 0.10.0
libtpu: 0.0.40
codegen_flags: <defaults>
</compile_context>

<pallas_src>
import functools

import jax
import jax.numpy as jnp
from jax.experimental import pallas as pl
from jax.experimental.pallas import tpu as pltpu


def _round_up(x, m):
    return (x + m - 1) // m * m


def _vmem_budget_and_limit():
    """Generation-aware scratch budget and scoped-VMEM limit."""
    cap = None
    try:
        info = pltpu.get_tpu_info()
        cap = getattr(info, "vmem_capacity_bytes", None)
    except Exception:
        cap = None
    if cap is None:
        cap = 64 * 1024 * 1024
    if cap >= 128 * 1024 * 1024:
        # v5e / v6e: 128 MiB physical VMEM -> raise both budget and limit.
        return 64 * 1024 * 1024, 96 * 1024 * 1024
    # v7x (64 MiB per TensorCore) or unknown: stay conservative.
    return 28 * 1024 * 1024, 48 * 1024 * 1024


# ---------------------- fused LayerNorm + Linear kernel ----------------------
def _prenorm_linear_kernel(x_ref, gamma_ref, beta_ref, w_ref, b_ref, o_ref,
                           y_ref, *, eps, d_actual):
    # Grid = (row tiles i, output column tiles j); j is innermost & "arbitrary".
    # LayerNorm is computed once per row tile (j == 0) into the y scratch and
    # reused for every column tile of W.
    j = pl.program_id(1)

    @pl.when(j == 0)
    def _():
        x = x_ref[...].astype(jnp.float32)          # (tile_m, Dp), padded lanes = 0
        inv_d = 1.0 / float(d_actual)
        s = jnp.sum(x, axis=-1, keepdims=True)      # padded lanes are zero -> exact
        sq = jnp.sum(x * x, axis=-1, keepdims=True)
        mean = s * inv_d
        var = jnp.maximum(sq * inv_d - mean * mean, 0.0)
        inv = jax.lax.rsqrt(var + eps)               # EUP slot
        g = gamma_ref[...].astype(jnp.float32)       # (1, Dp), zero in padded lanes
        b = beta_ref[...].astype(jnp.float32)
        y = (x - mean) * inv * g + b                 # padded lanes -> exactly 0
        y_ref[...] = y.astype(y_ref.dtype)           # compute/MXU dtype

    out = jnp.dot(y_ref[...], w_ref[...], preferred_element_type=jnp.float32)
    out = out + b_ref[...].astype(jnp.float32)
    o_ref[...] = out.astype(o_ref.dtype)


def pre_norm_linear(x, gamma, beta, w, bias, *, eps=1e-5, tile_m=None,
                    tile_n=None, compute_dtype=None):
    """Fused PreNorm with a Linear fn: LN(x) @ w + bias, single pallas_call."""
    orig_shape = x.shape
    D = orig_shape[-1]
    Dout = w.shape[1]
    x2 = x.reshape(-1, D)
    N = x2.shape[0]

    if compute_dtype is None:
        compute_dtype = w.dtype          # feed the MXU in the weight dtype
    w = w.astype(compute_dtype)

    # Lane-dense (multiple-of-128) feature dims.
    Dp = _round_up(D, 128)
    Dop = _round_up(Dout, 128)

    rows8 = _round_up(N, 8)
    if tile_m is None:
        tile_m = min(256, rows8)
        # Guarantee >= 2 row blocks when rows allow (megacore on v7x).
        if rows8 >= 16:
            tile_m = min(tile_m, _round_up((rows8 + 1) // 2, 8))
    tile_m = max(8, min(_round_up(tile_m, 8), rows8))

    # Default: keep W fully VMEM-resident (single j step, constant W index).
    if tile_n is None:
        tile_n = Dop
    tile_n = min(_round_up(tile_n, 128), Dop)
    while Dop % tile_n:
        tile_n -= 128

    x_item = jnp.dtype(x.dtype).itemsize
    w_item = jnp.dtype(compute_dtype).itemsize
    o_item = jnp.dtype(x.dtype).itemsize

    def _vmem_bytes(tm, tn):
        # Double-buffered BlockSpec buffers (x, W, bias, out)
        bufs = 2 * (tm * Dp * x_item + Dp * tn * w_item + tn * w_item
                    + tm * tn * o_item)
        # LN scratch (compute dtype), lives for the whole call.
        scratch = tm * Dp * w_item
        # In-kernel f32 intermediates: x upcast + y (tm*Dp each) + f32 out tile.
        interm = 2 * tm * Dp * 4 + tm * tn * 4
        return bufs + scratch + interm

    budget, vmem_limit = _vmem_budget_and_limit()

    def _shrink_tile_n(tn):
        tn -= 128
        while tn > 128 and Dop % tn:
            tn -= 128
        return max(tn, 128)

    # Shrink order: column-tile W first; keep tile_m at the MXU floor (128) if
    # at all possible, only then drop it further.
    while tile_n > 128 and _vmem_bytes(tile_m, tile_n) > budget:
        tile_n = _shrink_tile_n(tile_n)
    # TODO(synk): for very large D, K-tile W (extra 'arbitrary' k axis + f32
    # accumulator) instead of shrinking tile_m below the MXU floor.
    mxu_floor = min(128, tile_m)
    while tile_m > mxu_floor and _vmem_bytes(tile_m, tile_n) > budget:
        new_m = max(mxu_floor, _round_up(tile_m // 2, 8))
        if new_m == tile_m:
            break
        tile_m = new_m
    while tile_m > 8 and _vmem_bytes(tile_m, tile_n) > budget:
        new_m = max(8, _round_up(tile_m // 2, 8))
        if new_m == tile_m:
            break
        tile_m = new_m

    Np = _round_up(N, tile_m)

    # Conditional zero-padding (skip the extra HBM round-trip when aligned).
    x_p = x2 if (Np == N and Dp == D) else jnp.pad(x2, ((0, Np - N), (0, Dp - D)))
    g2 = gamma.reshape(1, D)
    be2 = beta.reshape(1, D)
    bias2 = bias.reshape(1, Dout)
    g_p = g2 if Dp == D else jnp.pad(g2, ((0, 0), (0, Dp - D)))
    be_p = be2 if Dp == D else jnp.pad(be2, ((0, 0), (0, Dp - D)))
    w_p = w if (Dp == D and Dop == Dout) else jnp.pad(w, ((0, Dp - D), (0, Dop - Dout)))
    bias_p = bias2 if Dop == Dout else jnp.pad(bias2, ((0, 0), (0, Dop - Dout)))
    bias_p = bias_p.astype(compute_dtype)

    grid = (Np // tile_m, Dop // tile_n)

    out = pl.pallas_call(
        functools.partial(_prenorm_linear_kernel, eps=eps, d_actual=D),
        out_shape=jax.ShapeDtypeStruct((Np, Dop), x.dtype),
        grid_spec=pltpu.PrefetchScalarGridSpec(
            num_scalar_prefetch=0,
            grid=grid,
            in_specs=[
                pl.BlockSpec((tile_m, Dp), lambda i, j: (i, 0)),   # x rows (reused over j)
                pl.BlockSpec((1, Dp), lambda i, j: (0, 0)),        # gamma (resident)
                pl.BlockSpec((1, Dp), lambda i, j: (0, 0)),        # beta  (resident)
                pl.BlockSpec((Dp, tile_n), lambda i, j: (0, j)),   # W (resident when 1 j-step)
                pl.BlockSpec((1, tile_n), lambda i, j: (0, j)),    # bias column tile
            ],
            out_specs=pl.BlockSpec((tile_m, tile_n), lambda i, j: (i, j)),
            scratch_shapes=[pltpu.VMEM((tile_m, Dp), compute_dtype)],  # LN cache
        ),
        compiler_params=pltpu.CompilerParams(
            # j must be sequential so the LN scratch is reused across column tiles.
            dimension_semantics=("parallel", "arbitrary"),
            vmem_limit_bytes=vmem_limit,
        ),
    )(x_p, g_p, be_p, w_p, bias_p)

    if Np != N or Dop != Dout:
        out = out[:N, :Dout]
    return out.reshape(orig_shape[:-1] + (Dout,))


# ------------------------- standalone LayerNorm kernel -----------------------
# Used by the generic PreNorm path when `fn` has no fused Pallas implementation.
def _layernorm_kernel(x_ref, gamma_ref, beta_ref, o_ref, *, eps, d_actual):
    x = x_ref[...].astype(jnp.float32)
    inv_d = 1.0 / float(d_actual)
    mean = jnp.sum(x, axis=-1, keepdims=True) * inv_d
    var = jnp.maximum(jnp.sum(x * x, axis=-1, keepdims=True) * inv_d - mean * mean, 0.0)
    inv = jax.lax.rsqrt(var + eps)
    y = (x - mean) * inv * gamma_ref[...].astype(jnp.float32) \
        + beta_ref[...].astype(jnp.float32)
    o_ref[...] = y.astype(o_ref.dtype)


def layernorm_pallas(x, gamma, beta, *, eps=1e-5, tile_m=None):
    """LayerNorm over the last axis. x: [..., D]."""
    orig_shape = x.shape
    D = orig_shape[-1]
    x2 = x.reshape(-1, D)
    N = x2.shape[0]

    rows8 = _round_up(N, 8)
    if tile_m is None:
        tile_m = min(512, rows8)
        if rows8 >= 16:
            tile_m = min(tile_m, _round_up((rows8 + 1) // 2, 8))
    tile_m = max(8, min(_round_up(tile_m, 8), rows8))

    budget, vmem_limit = _vmem_budget_and_limit()
    item = jnp.dtype(x.dtype).itemsize

    def _ln_vmem_bytes(tm):
        # double-buffered in + out blocks, plus f32 x / y intermediates.
        return 2 * tm * D * item * 2 + 2 * tm * D * 4

    while tile_m > 8 and _ln_vmem_bytes(tile_m) > budget:
        new_m = max(8, _round_up(tile_m // 2, 8))
        if new_m == tile_m:
            break
        tile_m = new_m

    Np = _round_up(N, tile_m)
    x_p = x2 if Np == N else jnp.pad(x2, ((0, Np - N), (0, 0)))

    out = pl.pallas_call(
        functools.partial(_layernorm_kernel, eps=eps, d_actual=D),
        out_shape=jax.ShapeDtypeStruct((Np, D), x.dtype),
        grid_spec=pltpu.PrefetchScalarGridSpec(
            num_scalar_prefetch=0,
            grid=(Np // tile_m,),
            in_specs=[
                pl.BlockSpec((tile_m, D), lambda i: (i, 0)),
                pl.BlockSpec((1, D), lambda i: (0, 0)),
                pl.BlockSpec((1, D), lambda i: (0, 0)),
            ],
            out_specs=pl.BlockSpec((tile_m, D), lambda i: (i, 0)),
        ),
        compiler_params=pltpu.CompilerParams(
            dimension_semantics=("parallel",),
            vmem_limit_bytes=vmem_limit,
        ),
    )(x_p, gamma.reshape(1, D), beta.reshape(1, D))
    if Np != N:
        out = out[:N]
    return out.reshape(orig_shape)


# ----------------------------------- PreNorm ---------------------------------
def pre_norm(x, gamma, beta, fn, **kwargs):
    """Generic PreNorm.forward: fn(LayerNorm(x), **kwargs)."""
    # TODO(synk): `fn` is an arbitrary nn.Module in PyTorch; only the Linear
    # case is fused into a single Pallas kernel (pre_norm_linear).
    return fn(layernorm_pallas(x, gamma, beta), **kwargs)


if __name__ == "__main__":
    B, S, D = 2, 8, 32
    key = jax.random.PRNGKey(0)
    kx, kw, kb, kg, kbeta = jax.random.split(key, 5)

    x = jax.random.normal(kx, (B, S, D), dtype=jnp.float32)

    # LayerNorm params (PyTorch default is ones/zeros; perturb deterministically
    # so the affine path is exercised).
    gamma = jnp.ones((D,), jnp.float32) + 0.1 * jax.random.normal(kg, (D,), jnp.float32)
    beta = 0.1 * jax.random.normal(kbeta, (D,), jnp.float32)

    # Example `fn`: linear projection D -> D.
    w = jax.random.normal(kw, (D, D), dtype=jnp.float32) * (1.0 / (D ** 0.5))
    bias = 0.01 * jax.random.normal(kb, (D,), dtype=jnp.float32)

    # Fused PreNorm(Linear), f32 path: tile_m=8 -> 2 row grid steps even at this
    # tiny size (exercises the pipelined / megacore-friendly row grid).
    out_fused = pre_norm_linear(x, gamma, beta, w, bias, tile_m=8)

    # Fused PreNorm(Linear), bf16 MXU path (weights + normalized activations in
    # bf16, f32 accumulation).
    out_bf16 = pre_norm_linear(x, gamma, beta, w.astype(jnp.bfloat16), bias,
                               tile_m=8, compute_dtype=jnp.bfloat16)

    # Generic PreNorm path (arbitrary fn) using the standalone LN kernel.
    out_generic = pre_norm(x, gamma, beta, lambda t: t @ w + bias)

    jax.block_until_ready((out_fused, out_bf16, out_generic))

    # Reference in plain JAX.
    mean = jnp.mean(x, axis=-1, keepdims=True)
    var = jnp.mean((x - mean) ** 2, axis=-1, keepdims=True)
    ref_norm = (x - mean) / jnp.sqrt(var + 1e-5) * gamma + beta
    ref = ref_norm @ w + bias

    assert out_fused.shape == (B, S, D)
    assert jnp.allclose(out_fused, ref, atol=1e-4, rtol=1e-4)
    assert jnp.allclose(out_generic, ref, atol=1e-4, rtol=1e-4)
    assert jnp.allclose(out_bf16, ref, atol=5e-2, rtol=5e-2)

    print("KERNEL_OK")
</pallas_src>

<mosaic_0001>
module attributes {stable_mosaic.version = 11 : i64} {
  func.func @_prenorm_linear_kernel(%arg0: i32, %arg1: i32, %arg2: memref<8x128xf32, #tpu.memory_space<vmem>>, %arg3: memref<1x128xf32, #tpu.memory_space<vmem>>, %arg4: memref<1x128xf32, #tpu.memory_space<vmem>>, %arg5: memref<128x128xf32, #tpu.memory_space<vmem>>, %arg6: memref<1x128xf32, #tpu.memory_space<vmem>>, %arg7: memref<8x128xf32, #tpu.memory_space<vmem>>, %arg8: memref<8x128xf32, #tpu.memory_space<vmem>>) attributes {dimension_semantics = [#tpu.dimension_semantics<parallel>, #tpu.dimension_semantics<arbitrary>], iteration_bounds = array<i64: 2, 1>, scalar_prefetch = 0 : i64, scratch_operands = 1 : i64, tpu.core_type = #tpu.core_type<tc>, window_params = [{transform_indices = @transform_0, window_bounds = array<i64: 8, 128>}, {pipeline_mode = #tpu.pipeline_mode<synchronous>, transform_indices = @transform_1, window_bounds = array<i64: 1, 128>}, {pipeline_mode = #tpu.pipeline_mode<synchronous>, transform_indices = @transform_2, window_bounds = array<i64: 1, 128>}, {transform_indices = @transform_3, window_bounds = array<i64: 128, 128>}, {transform_indices = @transform_4, window_bounds = array<i64: 1, 128>}, {transform_indices = @transform_5, window_bounds = array<i64: 8, 128>}]} {
    %c0_i32 = arith.constant 0 : i32
    %0 = arith.cmpi eq, %arg1, %c0_i32 : i32
    %1 = arith.extui %0 : i1 to i32
    %c0_i32_0 = arith.constant 0 : i32
    %2 = arith.cmpi ne, %1, %c0_i32_0 : i32
    scf.if %2 {
      %c0_8 = arith.constant 0 : index
      %c0_9 = arith.constant 0 : index
      %10 = vector.load %arg2[%c0_8, %c0_9] : memref<8x128xf32, #tpu.memory_space<vmem>>, vector<8x128xf32>
      %cst_10 = arith.constant dense<0.000000e+00> : vector<8xf32>
      %11 = vector.multi_reduction <add>, %10, %cst_10 [1] : vector<8x128xf32> to vector<8xf32>
      %12 = vector.shape_cast %11 : vector<8xf32> to vector<8x1xf32>
      %13 = arith.mulf %10, %10 : vector<8x128xf32>
      %cst_11 = arith.constant dense<0.000000e+00> : vector<8xf32>
      %14 = vector.multi_reduction <add>, %13, %cst_11 [1] : vector<8x128xf32> to vector<8xf32>
      %15 = vector.shape_cast %14 : vector<8xf32> to vector<8x1xf32>
      %cst_12 = arith.constant 3.125000e-02 : f32
      %16 = vector.broadcast %cst_12 : f32 to vector<8x1xf32>
      %17 = arith.mulf %12, %16 : vector<8x1xf32>
      %cst_13 = arith.constant 3.125000e-02 : f32
      %18 = vector.broadcast %cst_13 : f32 to vector<8x1xf32>
      %19 = arith.mulf %15, %18 : vector<8x1xf32>
      %20 = arith.mulf %17, %17 : vector<8x1xf32>
      %21 = arith.subf %19, %20 : vector<8x1xf32>
      %cst_14 = arith.constant 0.000000e+00 : f32
      %22 = vector.broadcast %cst_14 : f32 to vector<8x1xf32>
      %23 = arith.maximumf %21, %22 : vector<8x1xf32>
      %cst_15 = arith.constant 9.99999974E-6 : f32
      %24 = vector.broadcast %cst_15 : f32 to vector<8x1xf32>
      %25 = arith.addf %23, %24 : vector<8x1xf32>
      %26 = math.rsqrt %25 : vector<8x1xf32>
      %c0_16 = arith.constant 0 : index
      %c0_17 = arith.constant 0 : index
      %27 = vector.load %arg3[%c0_16, %c0_17] : memref<1x128xf32, #tpu.memory_space<vmem>>, vector<1x128xf32>
      %c0_18 = arith.constant 0 : index
      %c0_19 = arith.constant 0 : index
      %28 = vector.load %arg4[%c0_18, %c0_19] : memref<1x128xf32, #tpu.memory_space<vmem>>, vector<1x128xf32>
      %29 = vector.broadcast %17 : vector<8x1xf32> to vector<8x128xf32>
      %30 = arith.subf %10, %29 : vector<8x128xf32>
      %31 = vector.broadcast %26 : vector<8x1xf32> to vector<8x128xf32>
      %32 = arith.mulf %30, %31 : vector<8x128xf32>
      %33 = vector.broadcast %27 : vector<1x128xf32> to vector<8x128xf32>
      %34 = arith.mulf %32, %33 : vector<8x128xf32>
      %35 = vector.broadcast %28 : vector<1x128xf32> to vector<8x128xf32>
      %36 = arith.addf %34, %35 : vector<8x128xf32>
      %c0_20 = arith.constant 0 : index
      %c0_21 = arith.constant 0 : index
      %37 = vector.load %arg8[%c0_20, %c0_21] : memref<8x128xf32, #tpu.memory_space<vmem>>, vector<8x128xf32>
      tpu.vector_store %arg8[%c0_20, %c0_21], %36 {strides = array<i32>} : memref<8x128xf32, #tpu.memory_space<vmem>>, vector<8x128xf32>,
    } else {
    }
    %c0 = arith.constant 0 : index
    %c0_1 = arith.constant 0 : index
    %3 = vector.load %arg8[%c0, %c0_1] : memref<8x128xf32, #tpu.memory_space<vmem>>, vector<8x128xf32>
    %c0_2 = arith.constant 0 : index
    %c0_3 = arith.constant 0 : index
    %4 = vector.load %arg5[%c0_2, %c0_3] : memref<128x128xf32, #tpu.memory_space<vmem>>, vector<128x128xf32>
    %cst = arith.constant dense<0.000000e+00> : vector<8x128xf32>
    %5 = tpu.matmul %3, %4, %cst {dimension_numbers = #tpu.dot_dimension_numbers<[1], [0], [0], [1], [0, 0, 1, 1], [], []>} : vector<8x128xf32>, vector<128x128xf32>, vector<8x128xf32> -> vector<8x128xf32>
    %c0_4 = arith.constant 0 : index
    %c0_5 = arith.constant 0 : index
    %6 = vector.load %arg6[%c0_4, %c0_5] : memref<1x128xf32, #tpu.memory_space<vmem>>, vector<1x128xf32>
    %7 = vector.broadcast %6 : vector<1x128xf32> to vector<8x128xf32>
    %8 = arith.addf %5, %7 : vector<8x128xf32>
    %c0_6 = arith.constant 0 : index
    %c0_7 = arith.constant 0 : index
    %9 = vector.load %arg7[%c0_6, %c0_7] : memref<8x128xf32, #tpu.memory_space<vmem>>, vector<8x128xf32>
    tpu.vector_store %arg7[%c0_6, %c0_7], %8 {strides = array<i32>} : memref<8x128xf32, #tpu.memory_space<vmem>>, vector<8x128xf32>,
    return
  }
  func.func @transform_0(%arg0: i32, %arg1: i32) -> (i32, i32) {
    %c0_i32 = arith.constant 0 : i32
    %c0_i32_0 = arith.constant 0 : i32
    return %arg0, %c0_i32 : i32, i32
  }
  func.func @transform_1(%arg0: i32, %arg1: i32) -> (i32, i32) {
    %c0_i32 = arith.constant 0 : i32
    %c0_i32_0 = arith.constant 0 : i32
    %c0_i32_1 = arith.constant 0 : i32
    return %c0_i32, %c0_i32_0 : i32, i32
  }
  func.func @transform_2(%arg0: i32, %arg1: i32) -> (i32, i32) {
    %c0_i32 = arith.constant 0 : i32
    %c0_i32_0 = arith.constant 0 : i32
    %c0_i32_1 = arith.constant 0 : i32
    return %c0_i32, %c0_i32_0 : i32, i32
  }
  func.func @transform_3(%arg0: i32, %arg1: i32) -> (i32, i32) {
    %c0_i32 = arith.constant 0 : i32
    %c0_i32_0 = arith.constant 0 : i32
    return %c0_i32, %arg1 : i32, i32
  }
  func.func @transform_4(%arg0: i32, %arg1: i32) -> (i32, i32) {
    %c0_i32 = arith.constant 0 : i32
    %c0_i32_0 = arith.constant 0 : i32
    return %c0_i32, %arg1 : i32, i32
  }
  func.func @transform_5(%arg0: i32, %arg1: i32) -> (i32, i32) {
    %c0_i32 = arith.constant 0 : i32
    return %arg0, %arg1 : i32, i32
  }
}

</mosaic_0001>

<llo_original>
// kernel: tpu_custom_call.1
$region0: #{tpu_custom_call.1}
  #allocation0 [shape = 'u32[]', space=smem, size = 0x4, offset = 0x4, fixed_abs, tag = 'smem constant byte address 0x4 - core index']
  #allocation1 [shape = 'u32[144,128]{1,0:T(1,128)}', space=vmem, size = 0x12000, scoped, tag = 'internal scratch']
  #allocation2 [shape = 'f32[8,128]{1,0:T(8,128)}', space=vmem, size = 0x1000, scoped, tag = 'scratch operand']
  %s0 = inlined_call_operand.hbm [shape: f32[16,128], index: 0, kind: input, shape index: {}]
  %s1 = inlined_call_operand.vmem [shape: f32[1,128], index: 1, kind: input, shape index: {}]
  %s2 = inlined_call_operand.vmem [shape: f32[1,128], index: 2, kind: input, shape index: {}]
  %s3 = inlined_call_operand.hbm [shape: f32[128,128], index: 3, kind: input, shape index: {}]
  %s4 = inlined_call_operand.vmem [shape: f32[1,128], index: 4, kind: input, shape index: {}]
  %s5 = inlined_call_operand.hbm [shape: f32[16,128], index: 5, kind: output, shape index: {}]
  %s6 = sld [smem:[#allocation0]]
  $region65: #{tpu_custom_call.1} parent=0
    _
  %s8 = ssub.s32 1, %s6
  %s9 = scalar_select 0, %s8, %s6
  $region1: #{tpu_custom_call.1} parent=0
    #allocation3 [shape = 'u8[8192]{0}', space=vmem, size = 0x2000, scoped, tag = 'input window, operand 0']
    #allocation4 [shape = 's32[2]{0}', space=sflag, size = 0x8, scoped, tag = 'scoped memory for tpu_custom_call.1']
    #allocation5 [shape = 's32[2]{0}', space=sflag, size = 0x8, scoped, tag = 'scoped memory for tpu_custom_call.1']
    #allocation6 [shape = 'u8[65536]{0}', space=vmem, size = 0x10000, scoped, tag = 'input window, operand 3, single buffered']
    #allocation7 [shape = 's32[1]{0}', space=sflag, size = 0x4, scoped, tag = 'scoped memory for tpu_custom_call.1']
    #allocation8 [shape = 'u8[8192]{0}', space=vmem, size = 0x2000, scoped, tag = 'output window, operand 0']
    %10 = vsyncpa [#allocation4], 0
    %s11 = scalar_lea.sflag [#allocation4], 1
    %12 = vsyncpa %s11, 0
    %13 = vsyncpa [#allocation7], 0
    %14 = vsyncpa [#allocation5], 0
    %s15 = scalar_lea.sflag [#allocation5], 1
    %16 = vsyncpa %s15, 0
    loop: start=0, step=1, limit=4
    $region2: #{tpu_custom_call.1} parent=1 // loop_pre_header
      _
    $region3: #{tpu_custom_call.1} parent=1 // loop_header
      %s18 = sphi 0, %s22
      %p19 = scmp.ge.s32.totalorder %s18, 4
      %s25 = sphi 0, %s37
      %s26 = sphi 0, %s33
      %s27 = sphi 0, %s25
      %s28 = sphi 0, %s26
      %s29 = sphi 0, %s27
      %s30 = sphi 0, %s28
      %s40 = sphi 0, %s42
      %s43 = sphi 0, %s40
      %s44 = sphi 0, %s43
      %s60 = sphi 0, %s44
      %s64 = sphi 0, %s64
      %s66 = sphi 0, %s64
      %s67 = sphi 0, %s66
      %s81 = sphi 0, %s67
      %s85 = sphi 0, %s85
      %s87 = sphi 0, %s85
      %s88 = sphi 0, %s87
      %s102 = sphi 0, %s88
      %s108 = sphi 0, %s110
      %s111 = sphi 0, %s108
      %s112 = sphi 0, %s111
      %s128 = sphi 0, %s112
      %s134 = sphi 0, %s136
      %s137 = sphi 0, %s134
      %s138 = sphi 0, %s137
      %s154 = sphi 0, %s138
      %s162 = sphi 0, %s164
      %s165 = sphi 0, %s162
      %s166 = sphi 0, %s165
      %s182 = sphi 0, %s166
    $region4: #{tpu_custom_call.1} parent=1 // loop_header_branch
      %21 = sbr.rel (%p19) target = $region8
    $region5: #{tpu_custom_call.1} parent=1 // loop_body
      %s23 = ssub.s32 %s18, 1
      %s24 = ssub.s32 %s18, 2
      %s31 = sadd.s32 1, %s26
      %p32 = scmp.ge.s32.totalorder %s31, 1
      %s33 = scalar_select %p32, 0, %s31
      %s34 = sadd.s32 1, %s25
      %s35 = scalar_select %p32, %s34, %s25
      %p36 = scmp.ge.s32.totalorder %s35, 2
      %s37 = scalar_select %p36, 0, %s35
      %s38 = ssub.s32 %s25, %s37
      %p39 = scmp.eq.s32.totalorder %s38, 0
      %s41 = sadd.s32 %s40, 1
      %s42 = scalar_select %p39, %s40, %s41
      %p45 = pneg %p39
      %p46 = scmp.eq.s32.totalorder %s18, 1
      %p47 = por %p45, %p46
      %p48 = scmp.ne.s32.totalorder %s40, %s43
      %p49 = scmp.eq.s32.totalorder %s18, 0
      %p50 = por %p48, %p49
      %p51 = scmp.ne.s32.totalorder %s40, %s43
      %p52 = scmp.eq.s32.totalorder %s23, 1
      %p53 = por %p51, %p52
      %p54 = scmp.ne.s32.totalorder %s43, %s44
      %p55 = scmp.eq.s32.totalorder %s23, 0
      %p56 = por %p54, %p55
      %p57 = scmp.ne.s32.totalorder %s43, %s44
      %p58 = scmp.eq.s32.totalorder %s24, 1
      %p59 = por %p57, %p58
      %p61 = scmp.ne.s32.totalorder %s44, %s60
      %p62 = scmp.eq.s32.totalorder %s24, 0
      %p63 = por %p61, %p62
      %s65 = sadd.s32 %s64, 1
      %p68 = scmp.eq.s32.totalorder %s18, 1
      %p69 = scmp.ne.s32.totalorder %s64, %s66
      %p70 = scmp.eq.s32.totalorder %s18, 0
      %p71 = por %p69, %p70
      %p72 = scmp.ne.s32.totalorder %s64, %s66
      %p73 = scmp.eq.s32.totalorder %s23, 1
      %p74 = por %p72, %p73
      %p75 = scmp.ne.s32.totalorder %s66, %s67
      %p76 = scmp.eq.s32.totalorder %s23, 0
      %p77 = por %p75, %p76
      %p78 = scmp.ne.s32.totalorder %s66, %s67
      %p79 = scmp.eq.s32.totalorder %s24, 1
      %p80 = por %p78, %p79
      %p82 = scmp.ne.s32.totalorder %s67, %s81
      %p83 = scmp.eq.s32.totalorder %s24, 0
      %p84 = por %p82, %p83
      %s86 = sadd.s32 %s85, 1
      %p89 = scmp.eq.s32.totalorder %s18, 1
      %p90 = scmp.ne.s32.totalorder %s85, %s87
      %p91 = scmp.eq.s32.totalorder %s18, 0
      %p92 = por %p90, %p91
      %p93 = scmp.ne.s32.totalorder %s85, %s87
      %p94 = scmp.eq.s32.totalorder %s23, 1
      %p95 = por %p93, %p94
      %p96 = scmp.ne.s32.totalorder %s87, %s88
      %p97 = scmp.eq.s32.totalorder %s23, 0
      %p98 = por %p96, %p97
      %p99 = scmp.ne.s32.totalorder %s87, %s88
      %p100 = scmp.eq.s32.totalorder %s24, 1
      %p101 = por %p99, %p100
      %p103 = scmp.ne.s32.totalorder %s88, %s102
      %p104 = scmp.eq.s32.totalorder %s24, 0
      %p105 = por %p103, %p104
      %s106 = ssub.s32 %s26, %s33
      %p107 = scmp.eq.s32.totalorder %s106, 0
      %s109 = sadd.s32 %s108, 1
      %s110 = scalar_select %p107, %s108, %s109
      %p113 = pneg %p107
      %p114 = scmp.eq.s32.totalorder %s18, 1
      %p115 = por %p113, %p114
      %p116 = scmp.ne.s32.totalorder %s108, %s111
      %p117 = scmp.eq.s32.totalorder %s18, 0
      %p118 = por %p116, %p117
      %p119 = scmp.ne.s32.totalorder %s108, %s111
      %p120 = scmp.eq.s32.totalorder %s23, 1
      %p121 = por %p119, %p120
      %p122 = scmp.ne.s32.totalorder %s111, %s112
      %p123 = scmp.eq.s32.totalorder %s23, 0
      %p124 = por %p122, %p123
      %p125 = scmp.ne.s32.totalorder %s111, %s112
      %p126 = scmp.eq.s32.totalorder %s24, 1
      %p127 = por %p125, %p126
      %p129 = scmp.ne.s32.totalorder %s112, %s128
      %p130 = scmp.eq.s32.totalorder %s24, 0
      %p131 = por %p129, %p130
      %s132 = ssub.s32 %s26, %s33
      %p133 = scmp.eq.s32.totalorder %s132, 0
      %s135 = sadd.s32 %s134, 1
      %s136 = scalar_select %p133, %s134, %s135
      %p139 = pneg %p133
      %p140 = scmp.eq.s32.totalorder %s18, 1
      %p141 = por %p139, %p140
      %p142 = scmp.ne.s32.totalorder %s134, %s137
      %p143 = scmp.eq.s32.totalorder %s18, 0
      %p144 = por %p142, %p143
      %p145 = scmp.ne.s32.totalorder %s134, %s137
      %p146 = scmp.eq.s32.totalorder %s23, 1
      %p147 = por %p145, %p146
      %p148 = scmp.ne.s32.totalorder %s137, %s138
      %p149 = scmp.eq.s32.totalorder %s23, 0
      %p150 = por %p148, %p149
      %p151 = scmp.ne.s32.totalorder %s137, %s138
      %p152 = scmp.eq.s32.totalorder %s24, 1
      %p153 = por %p151, %p152
      %p155 = scmp.ne.s32.totalorder %s138, %s154
      %p156 = scmp.eq.s32.totalorder %s24, 0
      %p157 = por %p155, %p156
      %s158 = ssub.s32 %s25, %s37
      %s159 = ssub.s32 %s26, %s33
      %s160 = sor.u32 %s158, %s159
      %p161 = scmp.eq.s32.totalorder %s160, 0
      %s163 = sadd.s32 %s162, 1
      %s164 = scalar_select %p161, %s162, %s163
      %p167 = pneg %p161
      %p168 = scmp.eq.s32.totalorder %s18, 1
      %p169 = por %p167, %p168
      %p170 = scmp.ne.s32.totalorder %s162, %s165
      %p171 = scmp.eq.s32.totalorder %s18, 0
      %p172 = por %p170, %p171
      %p173 = scmp.ne.s32.totalorder %s162, %s165
      %p174 = scmp.eq.s32.totalorder %s23, 1
      %p175 = por %p173, %p174
      %p176 = scmp.ne.s32.totalorder %s165, %s166
      %p177 = scmp.eq.s32.totalorder %s23, 0
      %p178 = por %p176, %p177
      %p179 = scmp.ne.s32.totalorder %s165, %s166
      %p180 = scmp.eq.s32.totalorder %s24, 1
      %p181 = por %p179, %p180
      %p183 = scmp.ne.s32.totalorder %s166, %s182
      %p184 = scmp.eq.s32.totalorder %s24, 0
      %p185 = por %p183, %p184
      %p186 = scmp.le.s32.totalorder 1, %s18
      %p187 = scmp.lt.s32.totalorder %s18, 3
      %p188 = pnand %p186, %p187
      %p189 = pneg %p188
      // Predicated region
      $region9: #{tpu_custom_call.1} parent=5 // pred_check
        _
      $region10: #{tpu_custom_call.1} parent=5 // pred_check_branch
        %191 = sbr.rel (%p188) target = $region12
      $region11: #{tpu_custom_call.1} parent=5 // pred_region
        %s192 = ssub.s32 %s18, 1
        // Predicated region
        $region13: #{tpu_custom_call.1} parent=11 // pred_check
          %p193 = pneg %p77
        $region14: #{tpu_custom_call.1} parent=11 // pred_check_branch
          %195 = sbr.rel (%p193) target = $region16
        $region15: #{tpu_custom_call.1} parent=11 // pred_region
          _
        $region16: #{tpu_custom_call.1} parent=11 // pred_fallthru
          _
        // Predicated region
        $region17: #{tpu_custom_call.1} parent=11 // pred_check
          %p196 = pneg %p98
        $region18: #{tpu_custom_call.1} parent=11 // pred_check_branch
          %198 = sbr.rel (%p196) target = $region20
        $region19: #{tpu_custom_call.1} parent=11 // pred_region
          _
        $region20: #{tpu_custom_call.1} parent=11 // pred_fallthru
          _
        // Predicated region
        $region21: #{tpu_custom_call.1} parent=11 // pred_check
          %p199 = pneg %p124
        $region22: #{tpu_custom_call.1} parent=11 // pred_check_branch
          %201 = sbr.rel (%p199) target = $region24
        $region23: #{tpu_custom_call.1} parent=11 // pred_region
          %s203 = ssub.s32 2048, 2048
          %204 = vsyncadd [#allocation7], %s203
          %s205 = smul.addr %s28, 128
          %s206 = scalar_lea.hbm %s3, %s205
          %s207 = sshll.u32 [#allocation6], 4
          %s208 = int_to_ptr.vmem [resolvable:$true] %s207
          %213 = dma.hbm_to_vmem [thread:$0]  %s206, 2048, %s208, [#allocation7], 128, 128, 8
        $region24: #{tpu_custom_call.1} parent=11 // pred_fallthru
          _
        // Predicated region
        $region25: #{tpu_custom_call.1} parent=11 // pred_check
          %p214 = pneg %p150
        $region26: #{tpu_custom_call.1} parent=11 // pred_check_branch
          %216 = sbr.rel (%p214) target = $region28
        $region27: #{tpu_custom_call.1} parent=11 // pred_region
          %p217 = scmp.lt.s32.totalorder %s28, 0
          %s218 = scalar_select %p217, %s28, 0
          %s219 = scalar_lea.vmem %s4, %s218
        $region28: #{tpu_custom_call.1} parent=11 // pred_fallthru
          _
      $region12: #{tpu_custom_call.1} parent=5 // pred_fallthru
        _
      %p220 = scmp.lt.s32.totalorder %s18, 2
      // Predicated region
      $region29: #{tpu_custom_call.1} parent=5 // pred_check
        %p221 = pneg %p220
      $region30: #{tpu_custom_call.1} parent=5 // pred_check_branch
        %223 = sbr.rel (%p221) target = $region32
      $region31: #{tpu_custom_call.1} parent=5 // pred_region
        // Predicated region
        $region33: #{tpu_custom_call.1} parent=31 // pred_check
          %p224 = pneg %p50
        $region34: #{tpu_custom_call.1} parent=31 // pred_check_branch
          %226 = sbr.rel (%p224) target = $region36
        $region35: #{tpu_custom_call.1} parent=31 // pred_region
          %s227 = sand.u32 %s40, 1
          %s228 = scalar_lea.sflag [#allocation4], %s227
          %s229 = sand.u32 %s40, 1
          %s230 = smul.addr %s229, 8
          %s231 = scalar_lea.vmem [#allocation3], %s230
          %s233 = ssub.s32 128, 128
          %234 = vsyncadd %s228, %s233
          %s235 = smul.addr %s25, 128
          %s236 = scalar_lea.hbm %s0, %s235
          %s238 = sshll.u32 %s231, 4
          %s239 = int_to_ptr.vmem [resolvable:$true] %s238
          %241 = dma.hbm_to_vmem [thread:$0]  %s236, 128, %s239, %s228
        $region36: #{tpu_custom_call.1} parent=31 // pred_fallthru
          _
      $region32: #{tpu_custom_call.1} parent=5 // pred_fallthru
        _
      %p242 = scmp.le.s32.totalorder 1, %s18
      %p243 = scmp.lt.s32.totalorder %s18, 3
      %p244 = pnand %p242, %p243
      %p245 = pneg %p244
      // Predicated region
      $region37: #{tpu_custom_call.1} parent=5 // pred_check
        _
      $region38: #{tpu_custom_call.1} parent=5 // pred_check_branch
        %247 = sbr.rel (%p244) target = $region40
      $region39: #{tpu_custom_call.1} parent=5 // pred_region
        %s248 = ssub.s32 %s18, 1
        %s249 = sand.u32 %s43, 1
        %s250 = scalar_lea.sflag [#allocation4], %s249
        %s251 = sand.u32 %s43, 1
        %s252 = smul.addr %s251, 8
        %s253 = scalar_lea.vmem [#allocation3], %s252
        // Predicated region
        $region41: #{tpu_custom_call.1} parent=39 // pred_check
          %p254 = pneg %p56
        $region42: #{tpu_custom_call.1} parent=39 // pred_check_branch
          %256 = sbr.rel (%p254) target = $region44
        $region43: #{tpu_custom_call.1} parent=39 // pred_region
          %257 = dma.done %s250, 128
        $region44: #{tpu_custom_call.1} parent=39 // pred_fallthru
          _
        // Predicated region
        $region45: #{tpu_custom_call.1} parent=39 // pred_check
          %p258 = pneg %p124
        $region46: #{tpu_custom_call.1} parent=39 // pred_check_branch
          %260 = sbr.rel (%p258) target = $region48
        $region47: #{tpu_custom_call.1} parent=39 // pred_region
          %261 = dma.done [#allocation7], 2048
        $region48: #{tpu_custom_call.1} parent=39 // pred_fallthru
          _
        %s262 = sand.u32 %s43, 1
        %s263 = scalar_lea.sflag [#allocation4], %s262
        %s264 = sand.u32 %s43, 1
        %s265 = smul.addr %s264, 8
        %s266 = scalar_lea.vmem [#allocation3], %s265
        %p267 = pneg %p56
        %p268 = pneg %p53
        %p269 = pneg %p77
        %p270 = pneg %p74
        %p271 = pneg %p98
        %p272 = pneg %p95
        %p273 = pneg %p124
        %p274 = pneg %p121
        %p275 = scmp.lt.s32.totalorder %s28, 0
        %s276 = scalar_select %p275, %s28, 0
        %s277 = scalar_lea.vmem %s4, %s276
        %p278 = pneg %p150
        %p279 = pneg %p147
        %p280 = pneg %p178
        %p281 = pneg %p175
        %s282 = sand.u32 %s165, 1
        %s283 = scalar_lea.sflag [#allocation5], %s282
        %s284 = sand.u32 %s165, 1
        %s285 = smul.addr %s284, 8
        %s286 = scalar_lea.vmem [#allocation8], %s285
        %p287 = scmp.lt.s32.totalorder %s28, 0
        %s288 = scalar_select %p287, %s28, 0
        %s289 = scalar_lea.vmem %s4, %s288
        %p290 = scmp.eq.s32.totalorder %s28, 0
        // Predicated region
        $region49: #{tpu_custom_call.1} parent=39 // pred_check
          %p291 = pneg %p290
        $region50: #{tpu_custom_call.1} parent=39 // pred_check_branch
          %293 = sbr.rel (%p291) target = $region52
        $region51: #{tpu_custom_call.1} parent=39 // pred_region
          %v294 = vld [vmem:[%s253] sm:$0xff]
          %295 = vadd.xlane.f32.xlu0 %v294
          %v296 = vpop.xlane.xlu0 %295
          %v297 = vmul.f32 %v294, %v294
          %298 = vadd.xlane.f32.xlu0 %v297
          %v299 = vpop.xlane.xlu0 %298
          %v300 = vmul.f32 %v296, 0.03125
          %v301 = vmul.f32 %v299, 0.03125
          %v302 = vmul.f32 %v300, %v300
          %v303 = vsub.f32 %v301, %v302
          %v304 = vmax.f32 %v303, 0.0
          %v305 = vadd.f32 %v304, 1e-05
          %v306 = vrsqrt.pop %v305
          %v307 = vld [vmem:[%s1] sm:$0x1]
          %v308 = vld [vmem:[%s2] sm:$0x1]
          %v309 = vsub.f32 %v294, %v300
          %v310 = vmul.f32 %v309, %v306
          %v312 = vlaneseq
          %v313 = vshrl.u32 %v312, 7
          %v314 = vsub.s32 0, %v313
          %v315 = vrot.slane %v307, %v314
          %v317 = vmul.f32 %v310, %v315
          %v319 = vlaneseq
          %v320 = vshrl.u32 %v319, 7
          %v321 = vsub.s32 0, %v320
          %v322 = vrot.slane %v308, %v321
          %v324 = vadd.f32 %v317, %v322
          %325 = vst [vmem:[#allocation2] sm:$0xff] %v324
        $region52: #{tpu_custom_call.1} parent=39 // pred_fallthru
          _
        %v326 = vld [vmem:[#allocation2] sm:$0xff]
        %v327 = vld [vmem:[#allocation6] sm:$0xff]
        %v328 = vld [vmem:[#allocation6 + $0x8] sm:$0xff]
        %v329 = vld [vmem:[#allocation6 + $0x10] sm:$0xff]
        %v330 = vld [vmem:[#allocation6 + $0x18] sm:$0xff]
        %v331 = vld [vmem:[#allocation6 + $0x20] sm:$0xff]
        %v332 = vld [vmem:[#allocation6 + $0x28] sm:$0xff]
        %v333 = vld [vmem:[#allocation6 + $0x30] sm:$0xff]
        %v334 = vld [vmem:[#allocation6 + $0x38] sm:$0xff]
        %v335 = vld [vmem:[#allocation6 + $0x40] sm:$0xff]
        %v336 = vld [vmem:[#allocation6 + $0x48] sm:$0xff]
        %v337 = vld [vmem:[#allocation6 + $0x50] sm:$0xff]
        %v338 = vld [vmem:[#allocation6 + $0x58] sm:$0xff]
        %v339 = vld [vmem:[#allocation6 + $0x60] sm:$0xff]
        %v340 = vld [vmem:[#allocation6 + $0x68] sm:$0xff]
        %v341 = vld [vmem:[#allocation6 + $0x70] sm:$0xff]
        %v342 = vld [vmem:[#allocation6 + $0x78] sm:$0xff]
        %v343 = vld [vmem:[%s289] sm:$0x1]
        %v345 = vlaneseq
        %v346 = vshrl.u32 %v345, 7
        %v347 = vsub.s32 0, %v346
        %v348 = vrot.slane %v343, %v347
        %350 = vmatprep.subr.mxu0 0.0
        %351 = vmatpush1.msra.mxu0 %v327
        %352 = vmatprep.subr.mxu0 0.0
        %353 = vmatpush1.msra.mxu0 %v328
        %354 = vmatprep.subr.mxu0 0.0
        %355 = vmatpush1.msra.mxu0 %v329
        %356 = vmatprep.subr.mxu0 0.0
        %357 = vmatpush1.msra.mxu0 %v330
        %358 = vmatprep.subr.mxu0 0.0
        %359 = vmatpush1.msra.mxu0 %v331
        %360 = vmatprep.subr.mxu0 0.0
        %361 = vmatpush1.msra.mxu0 %v332
        %362 = vmatprep.subr.mxu0 0.0
        %363 = vmatpush1.msra.mxu0 %v333
        %364 = vmatprep.subr.mxu0 0.0
        %365 = vmatpush1.msra.mxu0 %v334
        %366 = vmatprep.subr.mxu0 0.0
        %367 = vmatpush1.msra.mxu0 %v335
        %368 = vmatprep.subr.mxu0 0.0
        %369 = vmatpush1.msra.mxu0 %v336
        %370 = vmatprep.subr.mxu0 0.0
        %371 = vmatpush1.msra.mxu0 %v337
        %372 = vmatprep.subr.mxu0 0.0
        %373 = vmatpush1.msra.mxu0 %v338
        %374 = vmatprep.subr.mxu0 0.0
        %375 = vmatpush1.msra.mxu0 %v339
        %376 = vmatprep.subr.mxu0 0.0
        %377 = vmatpush1.msra.mxu0 %v340
        %378 = vmatprep.subr.mxu0 0.0
        %379 = vmatpush1.msra.mxu0 %v341
        %380 = vmatprep.subr.mxu0 0.0
        %381 = vmatpush1.msra.mxu0 %v342
        %382 = vmatprep.subr.mxu0 0.0
        %383 = vmatpush1.msra.mxu0 0.0
        %384 = vmatprep.subr.mxu0 0.0
        %385 = vmatpush1.msra.mxu0 0.0
        %386 = vmatprep.subr.mxu0 0.0
        %387 = vmatpush1.msra.mxu0 0.0
        %388 = vmatprep.subr.mxu0 0.0
        %389 = vmatpush1.msra.mxu0 0.0
        %390 = vmatprep.subr.mxu0 0.0
        %391 = vmatpush1.msra.mxu0 0.0
        %392 = vmatprep.subr.mxu0 0.0
        %393 = vmatpush1.msra.mxu0 0.0
        %394 = vmatprep.subr.mxu0 0.0
        %395 = vmatpush1.msra.mxu0 0.0
        %396 = vmatprep.subr.mxu0 0.0
        %397 = vmatpush1.msra.mxu0 0.0
        %398 = vmatprep.subr.mxu0 0.0
        %399 = vmatpush1.msra.mxu0 0.0
        %400 = vmatprep.subr.mxu0 0.0
        %401 = vmatpush1.msra.mxu0 0.0
        %402 = vmatprep.subr.mxu0 0.0
        %403 = vmatpush1.msra.mxu0 0.0
        %404 = vmatprep.subr.mxu0 0.0
        %405 = vmatpush1.msra.mxu0 0.0
        %406 = vmatprep.subr.mxu0 0.0
        %407 = vmatpush1.msra.mxu0 0.0
        %408 = vmatprep.subr.mxu0 0.0
        %409 = vmatpush1.msra.mxu0 0.0
        %410 = vmatprep.subr.mxu0 0.0
        %411 = vmatpush1.msra.mxu0 0.0
        %412 = vmatprep.subr.mxu0 0.0
        %413 = vmatpush1.msra.mxu0 0.0
        %414 = vmatprep.mubr.f32.mxu0 0.0
        %415 = vmatmul.mubr.f32.gmra.mrb[0].mxu0 %v326
        %v416 = vpop.f32.mrb[0].mxu0
        %v417 = vadd.f32 %v348, %v416
        %v418 = vpop.f32.mrb[0].mxu0
        %419 = vdwg.mxu0
        %420 = vst [vmem:[%s286] sm:$0xff] %v417
        %s421 = sand.u32 %s165, 1
        %s422 = scalar_lea.sflag [#allocation5], %s421
        %s423 = sand.u32 %s165, 1
        %s424 = smul.addr %s423, 8
        %s425 = scalar_lea.vmem [#allocation8], %s424
        // Predicated region
        $region53: #{tpu_custom_call.1} parent=39 // pred_check
          %p426 = pneg %p175
        $region54: #{tpu_custom_call.1} parent=39 // pred_check_branch
          %428 = sbr.rel (%p426) target = $region56
        $region55: #{tpu_custom_call.1} parent=39 // pred_region
          %s430 = ssub.s32 128, 128
          %431 = vsyncadd %s422, %s430
          %s432 = sadd.s32 %s28, %s27
          %s433 = smul.addr %s432, 128
          %s434 = scalar_lea.hbm %s5, %s433
          %s436 = sshll.u32 %s425, 4
          %s437 = int_to_ptr.vmem [resolvable:$true] %s436
          %439 = dma.vmem_to_hbm [thread:$0]  %s437, 128, %s434, %s422
        $region56: #{tpu_custom_call.1} parent=39 // pred_fallthru
          _
      $region40: #{tpu_custom_call.1} parent=5 // pred_fallthru
        _
      %p440 = scmp.le.s32.totalorder 2, %s18
      // Predicated region
      $region57: #{tpu_custom_call.1} parent=5 // pred_check
        %p441 = pneg %p440
      $region58: #{tpu_custom_call.1} parent=5 // pred_check_branch
        %443 = sbr.rel (%p441) target = $region60
      $region59: #{tpu_custom_call.1} parent=5 // pred_region
        %s444 = ssub.s32 %s18, 2
        // Predicated region
        $region61: #{tpu_custom_call.1} parent=59 // pred_check
          %p445 = pneg %p181
        $region62: #{tpu_custom_call.1} parent=59 // pred_check_branch
          %447 = sbr.rel (%p445) target = $region64
        $region63: #{tpu_custom_call.1} parent=59 // pred_region
          %s448 = sand.u32 %s166, 1
          %s449 = scalar_lea.sflag [#allocation5], %s448
          %s450 = sand.u32 %s166, 1
          %s451 = smul.addr %s450, 8
          %s452 = scalar_lea.vmem [#allocation8], %s451
          %453 = dma.done %s449, 128
        $region64: #{tpu_custom_call.1} parent=59 // pred_fallthru
          _
      $region60: #{tpu_custom_call.1} parent=5 // pred_fallthru
        _
    $region6: #{tpu_custom_call.1} parent=1 // loop_footer
      %s22 = sadd.s32 1, %s18
    $region7: #{tpu_custom_call.1} parent=1 // loop_footer_branch
      %17 = sbr.rel target = $region3
    $region8: #{tpu_custom_call.1} parent=1 // loop_exit
      _
    %454 = vsyncpa [#allocation4], 1
    %s455 = scalar_lea.sflag [#allocation4], 1
    %456 = vsyncpa %s455, 1
    %457 = vsyncpa [#allocation7], 1
    %458 = vsyncpa [#allocation5], 1
    %s459 = scalar_lea.sflag [#allocation5], 1
    %460 = vsyncpa %s459, 1

</llo_original>
